<compile_context>
chip_gen: v7x
topology: tpu7x:2x2x1
jax: 0.10.0
libtpu: 0.0.40
codegen_flags: <defaults>
</compile_context>

<pallas_src>
import functools

import jax
import jax.numpy as jnp
from jax import lax
from jax.experimental import pallas as pl
from jax.experimental.pallas import tpu as pltpu

EPS = 1e-5
NEG_INF = -1e30  # additive stand-in for masked_fill(float('-inf')); keep f32


# --------------------------------------------------------------------------
# in-kernel helpers
# --------------------------------------------------------------------------
def _layer_norm(x, gamma, beta):
    mean = jnp.mean(x, axis=-1, keepdims=True)
    var = jnp.mean((x - mean) ** 2, axis=-1, keepdims=True)
    return (x - mean) * lax.rsqrt(var + EPS) * gamma + beta


def _gelu_exact(x):
    # matches torch.nn.functional.gelu (erf formulation)
    return 0.5 * x * (1.0 + lax.erf(x * 0.7071067811865476))


def _pick_block(n, candidates=(512, 256, 128, 64, 32, 16, 8)):
    for c in candidates:
        if n % c == 0:
            return c
    return n


# --------------------------------------------------------------------------
# Pallas kernels
# --------------------------------------------------------------------------
def embed_ln_kernel(tok_ref, pos_ref, g_ref, b_ref, o_ref):
    """x = LayerNorm(token_embeddings + position_embeddings), row-block tiled."""
    x = tok_ref[...] + pos_ref[...]
    o_ref[...] = _layer_norm(x, g_ref[...], b_ref[...])


def encoder_stack_kernel(x_ref, mask_ref,
                         wqkv_ref, bqkv_ref, wo_ref, bo_ref,
                         ln1g_ref, ln1b_ref,
                         w1_ref, b1_ref, w2_ref, b2_ref,
                         ln2g_ref, ln2b_ref,
                         o_ref, *, num_heads):
    """All encoder layers for one batch block.  Grid = (batch, layer).
    The hidden state lives in the resident output block o_ref across the layer
    axis (output block index depends only on the batch index)."""
    l = pl.program_id(1)

    @pl.when(l == 0)
    def _():
        o_ref[...] = x_ref[...]

    x = o_ref[...]                               # (S, D) resident f32 state
    S, D = x.shape
    H = num_heads
    hd = D // H

    # ---- fused QKV projection (1/sqrt(hd) pre-folded), bf16 MXU, f32 accum ----
    qkv = jnp.dot(x.astype(jnp.bfloat16), wqkv_ref[...],
                  preferred_element_type=jnp.float32) + bqkv_ref[...]  # (S, 3D)

    # ---- head-major relayout assembled once: (3H, S, hd) ----
    qkv_hm = jnp.concatenate(
        [qkv[:, i * hd:(i + 1) * hd].reshape(1, S, hd) for i in range(3 * H)],
        axis=0).astype(jnp.bfloat16)
    q = qkv_hm[:H]                               # (H, S, hd)
    k = qkv_hm[H:2 * H]
    v = qkv_hm[2 * H:]

    # ---- attention, batched over heads; mask + softmax in f32, applied once ----
    s = jnp.einsum('hqd,hkd->hqk', q, k,
                   preferred_element_type=jnp.float32)                 # (H, S, S)
    s = s + mask_ref[...]                        # (1, S) additive key mask
    s = s - jnp.max(s, axis=-1, keepdims=True)
    p = jnp.exp(s)
    p = p * pl.reciprocal(jnp.sum(p, axis=-1, keepdims=True), approx=True)
    ctx = jnp.einsum('hqk,hkd->hqd', p.astype(jnp.bfloat16), v,
                     preferred_element_type=jnp.float32)               # (H, S, hd)

    # ---- merge heads back onto lanes, single (D, D) out-projection matmul ----
    ctx2 = jnp.concatenate([ctx[h] for h in range(H)], axis=-1)        # (S, D)
    attn = jnp.dot(ctx2.astype(jnp.bfloat16), wo_ref[...],
                   preferred_element_type=jnp.float32) + bo_ref[...]   # (S, D)

    x1 = _layer_norm(x + attn, ln1g_ref[...], ln1b_ref[...])

    # ---- FFN (bf16 matmuls, f32 accumulation / epilogue) ----
    # TODO(synk): for BART-large (F=4096) + long sequences additionally tile the
    # FFN / attention over S chunks to stay within the 64 MiB v7x VMEM budget.
    h1 = jnp.dot(x1.astype(jnp.bfloat16), w1_ref[...],
                 preferred_element_type=jnp.float32) + b1_ref[...]     # (S, F)
    h1 = _gelu_exact(h1)
    h2 = jnp.dot(h1.astype(jnp.bfloat16), w2_ref[...],
                 preferred_element_type=jnp.float32) + b2_ref[...]     # (S, D)

    o_ref[...] = _layer_norm(x1 + h2, ln2g_ref[...], ln2b_ref[...])


# --------------------------------------------------------------------------
# wrappers
# --------------------------------------------------------------------------
def embed_layernorm(tok_emb2, pos_emb2, gamma, beta):
    """tok/pos are flattened to (B*S, D) so rows are lane-dense blocks."""
    R, D = tok_emb2.shape
    br = _pick_block(R)
    return pl.pallas_call(
        embed_ln_kernel,
        grid=(R // br,),
        in_specs=[pl.BlockSpec((br, D), lambda i: (i, 0)),
                  pl.BlockSpec((br, D), lambda i: (i, 0)),
                  pl.BlockSpec((1, D), lambda i: (0, 0)),
                  pl.BlockSpec((1, D), lambda i: (0, 0))],
        out_specs=pl.BlockSpec((br, D), lambda i: (i, 0)),
        out_shape=jax.ShapeDtypeStruct((R, D), jnp.float32),
        compiler_params=pltpu.CompilerParams(
            dimension_semantics=("parallel",)),
    )(tok_emb2, pos_emb2, gamma.reshape(1, D), beta.reshape(1, D))


def encoder_stack(x, mask_add, sp, num_heads):
    """Run all encoder layers in one pallas_call; sp holds (L, ...) stacked params."""
    B, S, D = x.shape
    L, _, threeD = sp['wqkv'].shape
    F = sp['w1'].shape[-1]
    H = num_heads

    kernel = functools.partial(encoder_stack_kernel, num_heads=num_heads)

    def vspec(dim):   # per-layer vector params stored as (L, 1, dim)
        return pl.BlockSpec((None, 1, dim), lambda b, l: (l, 0, 0))

    def mspec(d1, d2):  # per-layer matrices stored as (L, d1, d2)
        return pl.BlockSpec((None, d1, d2), lambda b, l: (l, 0, 0))

    in_specs = [
        pl.BlockSpec((None, S, D), lambda b, l: (b, 0, 0)),            # x
        pl.BlockSpec((None, 1, S), lambda b, l: (b, 0, 0)),            # additive mask
        mspec(D, threeD), vspec(threeD),                               # wqkv, bqkv
        mspec(D, D), vspec(D),                                         # wo, bo
        vspec(D), vspec(D),                                            # ln1 g, b
        mspec(D, F), vspec(F),                                         # w1, b1
        mspec(F, D), vspec(D),                                         # w2, b2
        vspec(D), vspec(D),                                            # ln2 g, b
    ]

    # VMEM budget: double-buffered per-layer weights + resident hidden / io blocks
    # + in-kernel intermediates + headroom, clamped for 64 MiB (v7x) parts.
    per_layer_bytes = sum(int(v.size * v.dtype.itemsize) for v in sp.values()) // L
    inter_bytes = 4 * (S * threeD + 2 * H * S * S + S * F + 6 * S * D)
    vmem_limit = int(min(96 * 2**20,
                         max(32 * 2**20,
                             3 * per_layer_bytes + inter_bytes + 8 * 2**20)))

    return pl.pallas_call(
        kernel,
        grid=(B, L),
        in_specs=in_specs,
        out_specs=pl.BlockSpec((None, S, D), lambda b, l: (b, 0, 0)),
        out_shape=jax.ShapeDtypeStruct((B, S, D), jnp.float32),
        compiler_params=pltpu.CompilerParams(
            dimension_semantics=("parallel", "arbitrary"),
            vmem_limit_bytes=vmem_limit),
    )(x, mask_add,
      sp['wqkv'], sp['bqkv'], sp['wo'], sp['bo'],
      sp['ln1_g'], sp['ln1_b'], sp['w1'], sp['b1'], sp['w2'], sp['b2'],
      sp['ln2_g'], sp['ln2_b'])


def bart_encoder_forward(input_ids, attention_mask, params, cfg):
    """Returns x of shape (src_len, batch, d_model).
    TODO(synk): output_hidden_states / output_attentions collection and
    training-time dropout / layerdrop are not reproduced (eval mode only)."""
    padding_idx = cfg['padding_idx']
    B, S = input_ids.shape
    D = cfg['d_model']

    # additive key-padding mask, computed ONCE host-side:  -1e30 where padded
    mask_add = jnp.where(attention_mask == 0, NEG_INF, 0.0).astype(jnp.float32)
    mask_add = mask_add.reshape(B, 1, S)

    # embedding gathers + position ids stay in plain JAX (glue)
    tok_emb = params['embed_tokens'][input_ids]                        # (B, S, D)
    not_pad = (input_ids != padding_idx).astype(jnp.int32)
    positions = jnp.cumsum(not_pad, axis=1) * not_pad + padding_idx
    pos_emb = params['embed_positions'][positions]                     # (B, S, D)

    x = embed_layernorm(tok_emb.reshape(B * S, D), pos_emb.reshape(B * S, D),
                        params['ln_emb_g'], params['ln_emb_b'])
    x = x.reshape(B, S, D)

    x = encoder_stack(x, mask_add, params['stack'], cfg['num_heads'])

    return jnp.transpose(x, (1, 0, 2))                                 # (S, B, D)


# --------------------------------------------------------------------------
# parameter construction / packing
# --------------------------------------------------------------------------
def init_params(key, cfg):
    D, F, V = cfg['d_model'], cfg['ffn_dim'], cfg['vocab_size']
    max_pos = cfg['max_position_embeddings'] + cfg['padding_idx'] + 1
    keys = iter(jax.random.split(key, 8 + 8 * cfg['num_layers']))

    def w(shape):
        return jax.random.normal(next(keys), shape, jnp.float32) * 0.02

    embed_tokens = w((V, D)).at[cfg['padding_idx']].set(0.0)
    embed_positions = w((max_pos, D)).at[cfg['padding_idx']].set(0.0)

    layers = []
    for _ in range(cfg['num_layers']):
        layers.append(dict(
            wq=w((D, D)), bq=jnp.zeros((D,), jnp.float32),
            wk=w((D, D)), bk=jnp.zeros((D,), jnp.float32),
            wv=w((D, D)), bv=jnp.zeros((D,), jnp.float32),
            wo=w((D, D)), bo=jnp.zeros((D,), jnp.float32),
            ln1_g=jnp.ones((D,), jnp.float32), ln1_b=jnp.zeros((D,), jnp.float32),
            w1=w((D, F)), b1=jnp.zeros((F,), jnp.float32),
            w2=w((F, D)), b2=jnp.zeros((D,), jnp.float32),
            ln2_g=jnp.ones((D,), jnp.float32), ln2_b=jnp.zeros((D,), jnp.float32),
        ))

    return dict(
        embed_tokens=embed_tokens,
        embed_positions=embed_positions,
        ln_emb_g=jnp.ones((D,), jnp.float32),
        ln_emb_b=jnp.zeros((D,), jnp.float32),
        layers=layers,                     # fp32 per-layer (reference)
        stack=pack_layer_stack(layers, cfg['num_heads']),
    )


def pack_layer_stack(layers, num_heads):
    """Stack per-layer weights into (L, ...) arrays: fused+scaled QKV, bf16
    weights, fp32 biases / LN params."""
    D = layers[0]['wq'].shape[0]
    hd = D // num_heads
    scale = 1.0 / float(hd) ** 0.5

    def stack(fn, dtype=None):
        a = jnp.stack([fn(p) for p in layers], axis=0)
        return a.astype(dtype) if dtype is not None else a

    return dict(
        wqkv=stack(lambda p: jnp.concatenate(
            [p['wq'] * scale, p['wk'], p['wv']], axis=1), jnp.bfloat16),   # (L,D,3D)
        bqkv=stack(lambda p: jnp.concatenate(
            [p['bq'] * scale, p['bk'], p['bv']], axis=0)[None, :]),        # (L,1,3D)
        wo=stack(lambda p: p['wo'], jnp.bfloat16),                         # (L,D,D)
        bo=stack(lambda p: p['bo'][None, :]),
        ln1_g=stack(lambda p: p['ln1_g'][None, :]),
        ln1_b=stack(lambda p: p['ln1_b'][None, :]),
        w1=stack(lambda p: p['w1'], jnp.bfloat16),
        b1=stack(lambda p: p['b1'][None, :]),
        w2=stack(lambda p: p['w2'], jnp.bfloat16),
        b2=stack(lambda p: p['b2'][None, :]),
        ln2_g=stack(lambda p: p['ln2_g'][None, :]),
        ln2_b=stack(lambda p: p['ln2_b'][None, :]),
    )


# --------------------------------------------------------------------------
# pure-JAX fp32 reference (unfused math, mirrors the PyTorch module)
# --------------------------------------------------------------------------
def _ref_layer(x, pad, p, num_heads):
    B, S, D = x.shape
    hd = D // num_heads
    scaling = 1.0 / float(hd) ** 0.5
    q = (x.reshape(B * S, D) @ p['wq'] + p['bq']) * scaling
    k = x.reshape(B * S, D) @ p['wk'] + p['bk']
    v = x.reshape(B * S, D) @ p['wv'] + p['bv']
    q = q.reshape(B, S, num_heads, hd).transpose(0, 2, 1, 3)
    k = k.reshape(B, S, num_heads, hd).transpose(0, 2, 1, 3)
    v = v.reshape(B, S, num_heads, hd).transpose(0, 2, 1, 3)
    s = jnp.einsum('bhqd,bhkd->bhqk', q, k)
    s = jnp.where(pad[:, None, None, :] > 0.5, NEG_INF, s)
    p_attn = jax.nn.softmax(s, axis=-1)
    attn = jnp.einsum('bhqk,bhkd->bhqd', p_attn, v)
    attn = attn.transpose(0, 2, 1, 3).reshape(B * S, D) @ p['wo'] + p['bo']
    attn = attn.reshape(B, S, D)
    x = _layer_norm(x + attn, p['ln1_g'], p['ln1_b'])
    h1 = _gelu_exact(x.reshape(B * S, D) @ p['w1'] + p['b1'])
    h2 = (h1 @ p['w2'] + p['b2']).reshape(B, S, D)
    return _layer_norm(x + h2, p['ln2_g'], p['ln2_b'])


def ref_forward(input_ids, attention_mask, params, cfg):
    padding_idx = cfg['padding_idx']
    pad_mask = (attention_mask == 0).astype(jnp.float32)
    tok_emb = params['embed_tokens'][input_ids]
    not_pad = (input_ids != padding_idx).astype(jnp.int32)
    positions = jnp.cumsum(not_pad, axis=1) * not_pad + padding_idx
    pos_emb = params['embed_positions'][positions]
    x = _layer_norm(tok_emb + pos_emb, params['ln_emb_g'], params['ln_emb_b'])
    for lp in params['layers']:
        x = _ref_layer(x, pad_mask, lp, cfg['num_heads'])
    return jnp.transpose(x, (1, 0, 2))


# --------------------------------------------------------------------------
# main
# --------------------------------------------------------------------------
if __name__ == "__main__":
    cfg = dict(
        vocab_size=100,
        d_model=32,
        num_heads=4,
        ffn_dim=64,
        num_layers=2,
        max_position_embeddings=64,
        padding_idx=1,
    )
    B, S = 2, 8

    key = jax.random.PRNGKey(0)
    k_par, k_ids = jax.random.split(key)
    params = init_params(k_par, cfg)

    input_ids = jax.random.randint(k_ids, (B, S), 2, cfg['vocab_size'],
                                   dtype=jnp.int32)
    # pad the last two positions of the second sequence
    input_ids = input_ids.at[1, -2:].set(cfg['padding_idx'])
    attention_mask = jnp.ones((B, S), jnp.int32).at[1, -2:].set(0)

    out = bart_encoder_forward(input_ids, attention_mask, params, cfg)
    out = jax.block_until_ready(out)
    assert out.shape == (S, B, cfg['d_model'])
    assert bool(jnp.all(jnp.isfinite(out)))

    # bf16 matmuls + approx reciprocal vs fp32 reference -> modest tolerance
    ref = ref_forward(input_ids, attention_mask, params, cfg)
    assert bool(jnp.allclose(out, ref, rtol=5e-2, atol=5e-2)), "mismatch vs reference"

    print("KERNEL_OK")
</pallas_src>

<mosaic_0001>
module attributes {stable_mosaic.version = 11 : i64} {
  func.func @embed_ln_kernel(%arg0: i32, %arg1: memref<16x32xf32, #tpu.memory_space<vmem>>, %arg2: memref<16x32xf32, #tpu.memory_space<vmem>>, %arg3: memref<1x32xf32, #tpu.memory_space<vmem>>, %arg4: memref<1x32xf32, #tpu.memory_space<vmem>>, %arg5: memref<16x32xf32, #tpu.memory_space<vmem>>) attributes {dimension_semantics = [#tpu.dimension_semantics<parallel>], iteration_bounds = array<i64: 1>, scalar_prefetch = 0 : i64, scratch_operands = 0 : i64, tpu.core_type = #tpu.core_type<tc>, window_params = [{transform_indices = @transform_0, window_bounds = array<i64: 16, 32>}, {transform_indices = @transform_1, window_bounds = array<i64: 16, 32>}, {pipeline_mode = #tpu.pipeline_mode<synchronous>, transform_indices = @transform_2, window_bounds = array<i64: 1, 32>}, {pipeline_mode = #tpu.pipeline_mode<synchronous>, transform_indices = @transform_3, window_bounds = array<i64: 1, 32>}, {transform_indices = @transform_4, window_bounds = array<i64: 16, 32>}]} {
    %c0 = arith.constant 0 : index
    %c0_0 = arith.constant 0 : index
    %0 = vector.load %arg1[%c0, %c0_0] : memref<16x32xf32, #tpu.memory_space<vmem>>, vector<16x32xf32>
    %c0_1 = arith.constant 0 : index
    %c0_2 = arith.constant 0 : index
    %1 = vector.load %arg2[%c0_1, %c0_2] : memref<16x32xf32, #tpu.memory_space<vmem>>, vector<16x32xf32>
    %2 = arith.addf %0, %1 : vector<16x32xf32>
    %c0_3 = arith.constant 0 : index
    %c0_4 = arith.constant 0 : index
    %3 = vector.load %arg3[%c0_3, %c0_4] : memref<1x32xf32, #tpu.memory_space<vmem>>, vector<1x32xf32>
    %c0_5 = arith.constant 0 : index
    %c0_6 = arith.constant 0 : index
    %4 = vector.load %arg4[%c0_5, %c0_6] : memref<1x32xf32, #tpu.memory_space<vmem>>, vector<1x32xf32>
    %cst = arith.constant dense<0.000000e+00> : vector<16xf32>
    %5 = vector.multi_reduction <add>, %2, %cst [1] : vector<16x32xf32> to vector<16xf32>
    %6 = vector.shape_cast %5 : vector<16xf32> to vector<16x1xf32>
    %cst_7 = arith.constant 3.200000e+01 : f32
    %7 = vector.broadcast %cst_7 : f32 to vector<16x1xf32>
    %8 = arith.divf %6, %7 : vector<16x1xf32>
    %9 = vector.broadcast %8 : vector<16x1xf32> to vector<16x32xf32>
    %10 = arith.subf %2, %9 : vector<16x32xf32>
    %11 = arith.mulf %10, %10 : vector<16x32xf32>
    %cst_8 = arith.constant dense<0.000000e+00> : vector<16xf32>
    %12 = vector.multi_reduction <add>, %11, %cst_8 [1] : vector<16x32xf32> to vector<16xf32>
    %13 = vector.shape_cast %12 : vector<16xf32> to vector<16x1xf32>
    %cst_9 = arith.constant 3.200000e+01 : f32
    %14 = vector.broadcast %cst_9 : f32 to vector<16x1xf32>
    %15 = arith.divf %13, %14 : vector<16x1xf32>
    %16 = vector.broadcast %8 : vector<16x1xf32> to vector<16x32xf32>
    %17 = arith.subf %2, %16 : vector<16x32xf32>
    %cst_10 = arith.constant 9.99999974E-6 : f32
    %18 = vector.broadcast %cst_10 : f32 to vector<16x1xf32>
    %19 = arith.addf %15, %18 : vector<16x1xf32>
    %20 = math.rsqrt %19 : vector<16x1xf32>
    %21 = vector.broadcast %20 : vector<16x1xf32> to vector<16x32xf32>
    %22 = arith.mulf %17, %21 : vector<16x32xf32>
    %23 = vector.broadcast %3 : vector<1x32xf32> to vector<16x32xf32>
    %24 = arith.mulf %22, %23 : vector<16x32xf32>
    %25 = vector.broadcast %4 : vector<1x32xf32> to vector<16x32xf32>
    %26 = arith.addf %24, %25 : vector<16x32xf32>
    %c0_11 = arith.constant 0 : index
    %c0_12 = arith.constant 0 : index
    %27 = vector.load %arg5[%c0_11, %c0_12] : memref<16x32xf32, #tpu.memory_space<vmem>>, vector<16x32xf32>
    tpu.vector_store %arg5[%c0_11, %c0_12], %26 {strides = array<i32>} : memref<16x32xf32, #tpu.memory_space<vmem>>, vector<16x32xf32>,
    return
  }
  func.func @transform_0(%arg0: i32) -> (i32, i32) {
    %c0_i32 = arith.constant 0 : i32
    %c0_i32_0 = arith.constant 0 : i32
    return %arg0, %c0_i32 : i32, i32
  }
  func.func @transform_1(%arg0: i32) -> (i32, i32) {
    %c0_i32 = arith.constant 0 : i32
    %c0_i32_0 = arith.constant 0 : i32
    return %arg0, %c0_i32 : i32, i32
  }
  func.func @transform_2(%arg0: i32) -> (i32, i32) {
    %c0_i32 = arith.constant 0 : i32
    %c0_i32_0 = arith.constant 0 : i32
    %c0_i32_1 = arith.constant 0 : i32
    return %c0_i32, %c0_i32_0 : i32, i32
  }
  func.func @transform_3(%arg0: i32) -> (i32, i32) {
    %c0_i32 = arith.constant 0 : i32
    %c0_i32_0 = arith.constant 0 : i32
    %c0_i32_1 = arith.constant 0 : i32
    return %c0_i32, %c0_i32_0 : i32, i32
  }
  func.func @transform_4(%arg0: i32) -> (i32, i32) {
    %c0_i32 = arith.constant 0 : i32
    %c0_i32_0 = arith.constant 0 : i32
    return %arg0, %c0_i32 : i32, i32
  }
}

</mosaic_0001>

<llo_original>
// kernel: tpu_custom_call.1
$region0: #{tpu_custom_call.1}
  #allocation0 [shape = 'u32[]', space=smem, size = 0x4, offset = 0x4, fixed_abs, tag = 'smem constant byte address 0x4 - core index']
  #allocation1 [shape = 'u32[144,128]{1,0:T(1,128)}', space=vmem, size = 0x12000, scoped, tag = 'internal scratch']
  %s0 = inlined_call_operand.hbm [shape: f32[16,32], index: 0, kind: input, shape index: {}]
  %s1 = inlined_call_operand.hbm [shape: f32[16,32], index: 1, kind: input, shape index: {}]
  %s2 = inlined_call_operand.vmem [shape: f32[1,32], index: 2, kind: input, shape index: {}]
  %s3 = inlined_call_operand.vmem [shape: f32[1,32], index: 3, kind: input, shape index: {}]
  %s4 = inlined_call_operand.hbm [shape: f32[16,32], index: 4, kind: output, shape index: {}]
  %s5 = sld [smem:[#allocation0]]
  $region34: #{tpu_custom_call.1} parent=0
    _
  %s7 = ssub.s32 1, %s5
  %s8 = scalar_select 0, %s7, %s5
  $region1: #{tpu_custom_call.1} parent=0
    #allocation2 [shape = 'u8[8192]{0}', space=vmem, size = 0x2000, scoped, tag = 'input window, operand 0, single buffered']
    #allocation3 [shape = 's32[1]{0}', space=sflag, size = 0x4, scoped, tag = 'scoped memory for tpu_custom_call.1']
    #allocation4 [shape = 's32[1]{0}', space=sflag, size = 0x4, scoped, tag = 'scoped memory for tpu_custom_call.1']
    #allocation5 [shape = 'u8[8192]{0}', space=vmem, size = 0x2000, scoped, tag = 'input window, operand 1, single buffered']
    #allocation6 [shape = 's32[1]{0}', space=sflag, size = 0x4, scoped, tag = 'scoped memory for tpu_custom_call.1']
    #allocation7 [shape = 'u8[8192]{0}', space=vmem, size = 0x2000, scoped, tag = 'output window, operand 0, single buffered']
    %9 = vsyncpa [#allocation3], 0
    %10 = vsyncpa [#allocation6], 0
    %11 = vsyncpa [#allocation4], 0
    // Predicated region
    $region2: #{tpu_custom_call.1} parent=1 // pred_check
      _
    $region3: #{tpu_custom_call.1} parent=1 // pred_check_branch
      %13 = sbr.rel (0) target = $region5
    $region4: #{tpu_custom_call.1} parent=1 // pred_region
      %s15 = ssub.s32 256, 256
      %16 = vsyncadd [#allocation3], %s15
      %s17 = sshll.u32 [#allocation2], 4
      %s18 = int_to_ptr.vmem [resolvable:$true] %s17
      %23 = dma.hbm_to_vmem [thread:$0]  %s0, 256, %s18, [#allocation3], 128, 128, 8
    $region5: #{tpu_custom_call.1} parent=1 // pred_fallthru
      _
    // Predicated region
    $region6: #{tpu_custom_call.1} parent=1 // pred_check
      _
    $region7: #{tpu_custom_call.1} parent=1 // pred_check_branch
      %25 = sbr.rel (0) target = $region9
    $region8: #{tpu_custom_call.1} parent=1 // pred_region
      %s27 = ssub.s32 256, 256
      %28 = vsyncadd [#allocation6], %s27
      %s29 = sshll.u32 [#allocation5], 4
      %s30 = int_to_ptr.vmem [resolvable:$true] %s29
      %35 = dma.hbm_to_vmem [thread:$0]  %s1, 256, %s30, [#allocation6], 128, 128, 8
    $region9: #{tpu_custom_call.1} parent=1 // pred_fallthru
      _
    // Predicated region
    $region10: #{tpu_custom_call.1} parent=1 // pred_check
      _
    $region11: #{tpu_custom_call.1} parent=1 // pred_check_branch
      %37 = sbr.rel (0) target = $region13
    $region12: #{tpu_custom_call.1} parent=1 // pred_region
      _
    $region13: #{tpu_custom_call.1} parent=1 // pred_fallthru
      _
    // Predicated region
    $region14: #{tpu_custom_call.1} parent=1 // pred_check
      _
    $region15: #{tpu_custom_call.1} parent=1 // pred_check_branch
      %39 = sbr.rel (0) target = $region17
    $region16: #{tpu_custom_call.1} parent=1 // pred_region
      _
    $region17: #{tpu_custom_call.1} parent=1 // pred_fallthru
      _
    // Predicated region
    $region18: #{tpu_custom_call.1} parent=1 // pred_check
      _
    $region19: #{tpu_custom_call.1} parent=1 // pred_check_branch
      %41 = sbr.rel (0) target = $region21
    $region20: #{tpu_custom_call.1} parent=1 // pred_region
      %42 = dma.done [#allocation3], 256
    $region21: #{tpu_custom_call.1} parent=1 // pred_fallthru
      _
    // Predicated region
    $region22: #{tpu_custom_call.1} parent=1 // pred_check
      _
    $region23: #{tpu_custom_call.1} parent=1 // pred_check_branch
      %44 = sbr.rel (0) target = $region25
    $region24: #{tpu_custom_call.1} parent=1 // pred_region
      %45 = dma.done [#allocation6], 256
    $region25: #{tpu_custom_call.1} parent=1 // pred_fallthru
      _
    %v46 = vld [vmem:[#allocation2] sm:$0xff]
    %v47 = vld [vmem:[#allocation2 + $0x8] sm:$0xff]
    %v48 = vld [vmem:[#allocation5] sm:$0xff]
    %v49 = vld [vmem:[#allocation5 + $0x8] sm:$0xff]
    %v50 = vadd.f32 %v46, %v48
    %v51 = vadd.f32 %v47, %v49
    %v52 = vld [vmem:[%s2] sm:$0x1]
    %v53 = vld [vmem:[%s3] sm:$0x1]
    %vm54 = vcmask 261120
    %v55 = vsel %vm54, %v50, 0.0
    %56 = vadd.xlane.f32.xlu0 %v55
    %v57 = vpop.xlane.xlu0 %56
    %v58 = vsel %vm54, %v51, 0.0
    %59 = vadd.xlane.f32.xlu0 %v58
    %v60 = vpop.xlane.xlu0 %59
    %v61 = vrcp.pop 32.0
    %v62 = vmul.f32 %v57, %v61
    %v63 = vmul.f32 %v60, %v61
    %v64 = vsub.f32 %v50, %v62
    %v65 = vsub.f32 %v51, %v63
    %v66 = vmul.f32 %v64, %v64
    %v67 = vmul.f32 %v65, %v65
    %v68 = vsel %vm54, %v66, 0.0
    %69 = vadd.xlane.f32.xlu0 %v68
    %v70 = vpop.xlane.xlu0 %69
    %v71 = vsel %vm54, %v67, 0.0
    %72 = vadd.xlane.f32.xlu0 %v71
    %v73 = vpop.xlane.xlu0 %72
    %v74 = vmul.f32 %v70, %v61
    %v75 = vmul.f32 %v73, %v61
    %v76 = vadd.f32 %v74, 1e-05
    %v77 = vadd.f32 %v75, 1e-05
    %v78 = vrsqrt.pop %v76
    %v79 = vrsqrt.pop %v77
    %v80 = vmul.f32 %v64, %v78
    %v81 = vmul.f32 %v65, %v79
    %v83 = vlaneseq
    %v84 = vshrl.u32 %v83, 7
    %v85 = vsub.s32 0, %v84
    %v86 = vrot.slane %v52, %v85
    %v88 = vmul.f32 %v80, %v86
    %v89 = vmul.f32 %v81, %v86
    %v91 = vlaneseq
    %v92 = vshrl.u32 %v91, 7
    %v93 = vsub.s32 0, %v92
    %v94 = vrot.slane %v53, %v93
    %v96 = vadd.f32 %v88, %v94
    %v97 = vadd.f32 %v89, %v94
    %98 = vst.msk [vmem:[#allocation7] sm:$0xff] %vm54, %v96
    %99 = vst.msk [vmem:[#allocation7 + $0x8] sm:$0xff] %vm54, %v97
    // Predicated region
    $region26: #{tpu_custom_call.1} parent=1 // pred_check
      _
    $region27: #{tpu_custom_call.1} parent=1 // pred_check_branch
      %101 = sbr.rel (0) target = $region29
    $region28: #{tpu_custom_call.1} parent=1 // pred_region
      %s103 = ssub.s32 256, 256
      %104 = vsyncadd [#allocation4], %s103
      %s105 = sshll.u32 [#allocation7], 4
      %s106 = int_to_ptr.vmem [resolvable:$true] %s105
      %111 = dma.vmem_to_hbm [thread:$0]  %s106, 256, %s4, [#allocation4], 128, 128, 8
    $region29: #{tpu_custom_call.1} parent=1 // pred_fallthru
      _
    // Predicated region
    $region30: #{tpu_custom_call.1} parent=1 // pred_check
      _
    $region31: #{tpu_custom_call.1} parent=1 // pred_check_branch
      %113 = sbr.rel (0) target = $region33
    $region32: #{tpu_custom_call.1} parent=1 // pred_region
      %114 = dma.done [#allocation4], 256
    $region33: #{tpu_custom_call.1} parent=1 // pred_fallthru
      _
    %115 = vsyncpa [#allocation3], 1
    %116 = vsyncpa [#allocation6], 1
    %117 = vsyncpa [#allocation4], 1

</llo_original>
